<compile_context>
chip_gen: v6e
topology: v6e:2x2x1
jax: 0.10.0
libtpu: 0.0.40
codegen_flags: <defaults>
</compile_context>

<pallas_src>
import functools

import jax
import jax.numpy as jnp
from jax.experimental import pallas as pl
from jax.experimental.pallas import tpu as pltpu


def _round_up(x, m):
    return ((x + m - 1) // m) * m


def _choose_batch_tile(B):
    """Batch tile: full (8-padded) batch when tiny; otherwise >=2 grid steps
    (keeps both v7x TensorCores busy on the "parallel" axis), capped at 1024
    rows per tile (v5e/v6e sweet spot; per-step overhead ~0.35us)."""
    if B <= 16:
        return _round_up(B, 8)
    half = _round_up((B + 1) // 2, 16)   # multiple of 16 -> bf16 sublane friendly
    return min(1024, half)


def _actor_critic_kernel(A, state_ref, act_ref, w1_ref, b1_ref, w2_ref, b2_ref,
                         wh_ref, bh_ref, out_ref):
    """A = num_actions (static).

    Fused head weight wh has width HP >= A+3:
      cols [0, A) = actor logits, col A = critic value, cols >= A+1 zero pad.
    Output slab: y with log_pi_a spliced into col A+1 and entropy into col A+2.
    """
    # --- features: Linear -> ReLU -> Linear (bf16 operands, f32 accumulation) ---
    x = state_ref[...]                                   # already bf16
    h = jnp.dot(x, w1_ref[...], preferred_element_type=jnp.float32) + b1_ref[...]
    h = jnp.maximum(h, 0.0)

    feats = jnp.dot(h.astype(jnp.bfloat16), w2_ref[...],
                    preferred_element_type=jnp.float32) + b2_ref[...]

    # --- fused actor+critic head (single MXU pass over padded width HP) ---
    fr = jnp.maximum(feats, 0.0)
    y = jnp.dot(fr.astype(jnp.bfloat16), wh_ref[...],
                preferred_element_type=jnp.float32) + bh_ref[...]   # (TB, HP)

    TB, HP = y.shape
    col = jax.lax.broadcasted_iota(jnp.int32, (TB, HP), 1)
    valid = col < A
    NEG = jnp.float32(-1e30)   # NOT -inf: exp underflows to exactly 0, no NaNs

    # Masked, max-subtracted softmax statistics over the A valid columns.
    lg = jnp.where(valid, y, NEG)
    m = jnp.max(lg, axis=-1, keepdims=True)
    z = lg - m
    e = jnp.exp(z)                                       # padded cols -> exactly 0
    se = jnp.sum(e, axis=-1, keepdims=True)
    lse = jnp.log(se)

    # log_prob(action) = z[action] - lse   (actions are always < A)
    z_act = jnp.sum(jnp.where(col == act_ref[...], z, 0.0),
                    axis=-1, keepdims=True)              # (TB, 1)
    logp = z_act - lse

    # entropy = lse - sum(e*z)/se   (no probs / log_probs materialized)
    inv_se = pl.reciprocal(se, approx=True)              # EUP slot, ~free
    ez = jnp.sum(jnp.where(valid, e * z, 0.0), axis=-1, keepdims=True)
    ent = lse - ez * inv_se                              # (TB, 1)

    # Single lane-dense output slab:
    #   cols [0, A): logits | col A: value (already in y) | col A+1: log_pi_a
    #   col A+2: entropy    | remaining padding columns keep y (zeros).
    out_ref[...] = jnp.where(col == A + 1, logp,
                   jnp.where(col == A + 2, ent, y))


def actor_critic_forward(state, action, params, action_dim):
    """state: (B, state_dim) f32, action: (B,) int32, params from init_params."""
    B, state_dim = state.shape
    h0 = params["w1"].shape[1]
    h1 = params["w2"].shape[1]
    HP = params["wh"].shape[1]
    A = action_dim
    # init_params guarantees HP >= A + 3 (log_pi_a / entropy columns exist).

    TB = _choose_batch_tile(B)
    Bp = _round_up(B, TB)

    state = state.astype(jnp.bfloat16)                   # halve state DMA
    if Bp != B:
        state = jnp.pad(state, ((0, Bp - B), (0, 0)))
        action = jnp.pad(action, (0, Bp - B))
    act2d = action.reshape(Bp, 1).astype(jnp.int32)

    grid = (Bp // TB,)
    row = lambda i: (i, 0)      # batch-tiled arrays
    const = lambda i: (0, 0)    # weights/biases: stay VMEM-resident across steps

    kernel = functools.partial(_actor_critic_kernel, A)

    flops = 2 * Bp * (state_dim * h0 + h0 * h1 + h1 * HP)
    transcendentals = Bp * (HP + 3)
    bytes_accessed = (
        state.size * 2 + act2d.size * 4                                     # inputs
        + (params["w1"].size + params["w2"].size + params["wh"].size) * 2   # bf16
        + (params["b1"].size + params["b2"].size + params["bh"].size) * 4   # f32
        + Bp * HP * 4                                                       # output
    )

    out = pl.pallas_call(
        kernel,
        out_shape=jax.ShapeDtypeStruct((Bp, HP), jnp.float32),
        grid=grid,
        in_specs=[
            pl.BlockSpec((TB, state_dim), row),
            pl.BlockSpec((TB, 1), row),
            pl.BlockSpec((state_dim, h0), const),
            pl.BlockSpec((1, h0), const),
            pl.BlockSpec((h0, h1), const),
            pl.BlockSpec((1, h1), const),
            pl.BlockSpec((h1, HP), const),
            pl.BlockSpec((1, HP), const),
        ],
        out_specs=pl.BlockSpec((TB, HP), row),
        compiler_params=pltpu.CompilerParams(
            dimension_semantics=("parallel",)),
        cost_estimate=pl.CostEstimate(
            flops=flops,
            transcendentals=transcendentals,
            bytes_accessed=bytes_accessed),
    )(state, act2d,
      params["w1"], params["b1"],
      params["w2"], params["b2"],
      params["wh"], params["bh"])

    logits = out[:B, :A]
    values = out[:B, A:A + 1]              # critic head, (B, 1) like PyTorch
    log_pi_a = out[:B, A + 1]              # Categorical.log_prob -> (B,)
    entropy = jnp.mean(out[:B, A + 2])     # entropy().mean(), valid rows only

    # TODO(synk): action=None branch (log_prob/entropy = None) handled at the
    # call site by ignoring log_pi_a / entropy.
    return {"logits": logits, "log_pi_a": log_pi_a, "v": values, "entropy": entropy}


def init_params(key, state_dim, action_dim, hidden_dims=(256, 256)):
    h0, h1 = hidden_dims
    ks = jax.random.split(key, 8)
    scale = 0.1
    w1 = scale * jax.random.normal(ks[0], (state_dim, h0), jnp.float32)
    b1 = scale * jax.random.normal(ks[1], (1, h0), jnp.float32)
    w2 = scale * jax.random.normal(ks[2], (h0, h1), jnp.float32)
    b2 = scale * jax.random.normal(ks[3], (1, h1), jnp.float32)
    wa = scale * jax.random.normal(ks[4], (h1, action_dim), jnp.float32)
    ba = scale * jax.random.normal(ks[5], (1, action_dim), jnp.float32)
    wc = scale * jax.random.normal(ks[6], (h1, 1), jnp.float32)
    bc = scale * jax.random.normal(ks[7], (1, 1), jnp.float32)

    # Fuse actor + critic heads into one lane-dense (h1, HP) matmul weight:
    # cols [0, A) = actor, col A = critic, rest zero padding.  HP is rounded up
    # from A+3 so the kernel can splice log_pi_a / entropy into cols A+1 / A+2.
    HP = _round_up(action_dim + 3, 128)
    wh = (jnp.zeros((h1, HP), jnp.float32)
          .at[:, :action_dim].set(wa)
          .at[:, action_dim:action_dim + 1].set(wc))
    bh = (jnp.zeros((1, HP), jnp.float32)
          .at[:, :action_dim].set(ba)
          .at[:, action_dim:action_dim + 1].set(bc))

    return {
        # matmul weights stored in bf16 (halves weight DMA; f32 accumulation)
        "w1": w1.astype(jnp.bfloat16),
        "w2": w2.astype(jnp.bfloat16),
        "wh": wh.astype(jnp.bfloat16),
        # biases stay f32 (added to f32 accumulators)
        "b1": b1, "b2": b2, "bh": bh,
        # unfused f32 originals, for the reference check only
        "_raw": dict(w1=w1, b1=b1, w2=w2, b2=b2, wa=wa, ba=ba, wc=wc, bc=bc),
    }


def _reference(state, action, raw):
    h = jnp.maximum(state @ raw["w1"] + raw["b1"], 0.0)
    feats = h @ raw["w2"] + raw["b2"]
    fr = jnp.maximum(feats, 0.0)
    logits = fr @ raw["wa"] + raw["ba"]
    values = fr @ raw["wc"] + raw["bc"]
    logp = jax.nn.log_softmax(logits, axis=-1)
    log_pi_a = jnp.take_along_axis(logp, action[:, None], axis=-1)[:, 0]
    probs = jnp.exp(logp)
    entropy = jnp.mean(-jnp.sum(probs * logp, axis=-1))
    return logits, values, log_pi_a, entropy


if __name__ == "__main__":
    key = jax.random.PRNGKey(0)
    k_param, k_state, k_act = jax.random.split(key, 3)

    B, state_dim, action_dim = 8, 16, 6
    hidden_dims = (128, 128)

    params = init_params(k_param, state_dim, action_dim, hidden_dims)
    state = jax.random.normal(k_state, (B, state_dim), jnp.float32)
    action = jax.random.randint(k_act, (B,), 0, action_dim, jnp.int32)

    out = actor_critic_forward(state, action, params, action_dim)
    jax.block_until_ready(out)

    assert out["logits"].shape == (B, action_dim)
    assert out["v"].shape == (B, 1)
    assert out["log_pi_a"].shape == (B,)
    assert out["entropy"].shape == ()

    # Loose-tolerance check vs f32 reference (matmuls run with bf16 operands,
    # entropy uses the approximate EUP reciprocal).
    ref_logits, ref_values, ref_logp, ref_ent = _reference(state, action, params["_raw"])
    assert jnp.allclose(out["logits"], ref_logits, atol=3e-2, rtol=5e-2)
    assert jnp.allclose(out["v"], ref_values, atol=3e-2, rtol=5e-2)
    assert jnp.allclose(out["log_pi_a"], ref_logp, atol=3e-2, rtol=5e-2)
    assert jnp.allclose(out["entropy"], ref_ent, atol=3e-2, rtol=5e-2)

    print("KERNEL_OK")
</pallas_src>

<mosaic_0001>
module attributes {stable_mosaic.version = 11 : i64} {
  func.func @_actor_critic_kernel(%arg0: i32, %arg1: memref<8x16xbf16, #tpu.memory_space<vmem>>, %arg2: memref<8x1xi32, #tpu.memory_space<vmem>>, %arg3: memref<16x128xbf16, #tpu.memory_space<vmem>>, %arg4: memref<1x128xf32, #tpu.memory_space<vmem>>, %arg5: memref<128x128xbf16, #tpu.memory_space<vmem>>, %arg6: memref<1x128xf32, #tpu.memory_space<vmem>>, %arg7: memref<128x128xbf16, #tpu.memory_space<vmem>>, %arg8: memref<1x128xf32, #tpu.memory_space<vmem>>, %arg9: memref<8x128xf32, #tpu.memory_space<vmem>>) attributes {dimension_semantics = [#tpu.dimension_semantics<parallel>], iteration_bounds = array<i64: 1>, scalar_prefetch = 0 : i64, scratch_operands = 0 : i64, tpu.core_type = #tpu.core_type<tc>, window_params = [{transform_indices = @transform_0, window_bounds = array<i64: 8, 16>}, {transform_indices = @transform_1, window_bounds = array<i64: 8, 1>}, {pipeline_mode = #tpu.pipeline_mode<synchronous>, transform_indices = @transform_2, window_bounds = array<i64: 16, 128>}, {pipeline_mode = #tpu.pipeline_mode<synchronous>, transform_indices = @transform_3, window_bounds = array<i64: 1, 128>}, {pipeline_mode = #tpu.pipeline_mode<synchronous>, transform_indices = @transform_4, window_bounds = array<i64: 128, 128>}, {pipeline_mode = #tpu.pipeline_mode<synchronous>, transform_indices = @transform_5, window_bounds = array<i64: 1, 128>}, {pipeline_mode = #tpu.pipeline_mode<synchronous>, transform_indices = @transform_6, window_bounds = array<i64: 128, 128>}, {pipeline_mode = #tpu.pipeline_mode<synchronous>, transform_indices = @transform_7, window_bounds = array<i64: 1, 128>}, {transform_indices = @transform_8, window_bounds = array<i64: 8, 128>}]} {
    %c0 = arith.constant 0 : index
    %c0_0 = arith.constant 0 : index
    %0 = vector.load %arg1[%c0, %c0_0] : memref<8x16xbf16, #tpu.memory_space<vmem>>, vector<8x16xbf16>
    %c0_1 = arith.constant 0 : index
    %c0_2 = arith.constant 0 : index
    %1 = vector.load %arg3[%c0_1, %c0_2] : memref<16x128xbf16, #tpu.memory_space<vmem>>, vector<16x128xbf16>
    %cst = arith.constant dense<0.000000e+00> : vector<8x128xf32>
    %2 = tpu.matmul %0, %1, %cst {dimension_numbers = #tpu.dot_dimension_numbers<[1], [0], [0], [1], [0, 0, 1, 1], [], []>} : vector<8x16xbf16>, vector<16x128xbf16>, vector<8x128xf32> -> vector<8x128xf32>
    %c0_3 = arith.constant 0 : index
    %c0_4 = arith.constant 0 : index
    %3 = vector.load %arg4[%c0_3, %c0_4] : memref<1x128xf32, #tpu.memory_space<vmem>>, vector<1x128xf32>
    %4 = vector.broadcast %3 : vector<1x128xf32> to vector<8x128xf32>
    %5 = arith.addf %2, %4 : vector<8x128xf32>
    %cst_5 = arith.constant 0.000000e+00 : f32
    %6 = vector.broadcast %cst_5 : f32 to vector<8x128xf32>
    %7 = arith.maximumf %5, %6 : vector<8x128xf32>
    %8 = arith.truncf %7 : vector<8x128xf32> to vector<8x128xbf16>
    %c0_6 = arith.constant 0 : index
    %c0_7 = arith.constant 0 : index
    %9 = vector.load %arg5[%c0_6, %c0_7] : memref<128x128xbf16, #tpu.memory_space<vmem>>, vector<128x128xbf16>
    %cst_8 = arith.constant dense<0.000000e+00> : vector<8x128xf32>
    %10 = tpu.matmul %8, %9, %cst_8 {dimension_numbers = #tpu.dot_dimension_numbers<[1], [0], [0], [1], [0, 0, 1, 1], [], []>} : vector<8x128xbf16>, vector<128x128xbf16>, vector<8x128xf32> -> vector<8x128xf32>
    %c0_9 = arith.constant 0 : index
    %c0_10 = arith.constant 0 : index
    %11 = vector.load %arg6[%c0_9, %c0_10] : memref<1x128xf32, #tpu.memory_space<vmem>>, vector<1x128xf32>
    %12 = vector.broadcast %11 : vector<1x128xf32> to vector<8x128xf32>
    %13 = arith.addf %10, %12 : vector<8x128xf32>
    %cst_11 = arith.constant 0.000000e+00 : f32
    %14 = vector.broadcast %cst_11 : f32 to vector<8x128xf32>
    %15 = arith.maximumf %13, %14 : vector<8x128xf32>
    %16 = arith.truncf %15 : vector<8x128xf32> to vector<8x128xbf16>
    %c0_12 = arith.constant 0 : index
    %c0_13 = arith.constant 0 : index
    %17 = vector.load %arg7[%c0_12, %c0_13] : memref<128x128xbf16, #tpu.memory_space<vmem>>, vector<128x128xbf16>
    %cst_14 = arith.constant dense<0.000000e+00> : vector<8x128xf32>
    %18 = tpu.matmul %16, %17, %cst_14 {dimension_numbers = #tpu.dot_dimension_numbers<[1], [0], [0], [1], [0, 0, 1, 1], [], []>} : vector<8x128xbf16>, vector<128x128xbf16>, vector<8x128xf32> -> vector<8x128xf32>
    %c0_15 = arith.constant 0 : index
    %c0_16 = arith.constant 0 : index
    %19 = vector.load %arg8[%c0_15, %c0_16] : memref<1x128xf32, #tpu.memory_space<vmem>>, vector<1x128xf32>
    %20 = vector.broadcast %19 : vector<1x128xf32> to vector<8x128xf32>
    %21 = arith.addf %18, %20 : vector<8x128xf32>
    %22 = tpu.iota {dimensions = array<i32: 1>} : vector<8x128xi32>
    %c6_i32 = arith.constant 6 : i32
    %23 = vector.broadcast %c6_i32 : i32 to vector<8x128xi32>
    %24 = arith.cmpi slt, %22, %23 : vector<8x128xi32>
    %cst_17 = arith.constant -1.000000e+30 : f32
    %25 = vector.broadcast %cst_17 : f32 to vector<8x128xf32>
    %26 = arith.select %24, %21, %25 : vector<8x128xi1>, vector<8x128xf32>
    %cst_18 = arith.constant dense<0xFF800000> : vector<8xf32>
    %27 = vector.multi_reduction <maximumf>, %26, %cst_18 [1] : vector<8x128xf32> to vector<8xf32>
    %28 = vector.shape_cast %27 : vector<8xf32> to vector<8x1xf32>
    %29 = vector.broadcast %28 : vector<8x1xf32> to vector<8x128xf32>
    %30 = arith.subf %26, %29 : vector<8x128xf32>
    %31 = math.exp %30 : vector<8x128xf32>
    %cst_19 = arith.constant dense<0.000000e+00> : vector<8xf32>
    %32 = vector.multi_reduction <add>, %31, %cst_19 [1] : vector<8x128xf32> to vector<8xf32>
    %33 = vector.shape_cast %32 : vector<8xf32> to vector<8x1xf32>
    %34 = math.log %33 : vector<8x1xf32>
    %c0_20 = arith.constant 0 : index
    %c0_21 = arith.constant 0 : index
    %35 = vector.load %arg2[%c0_20, %c0_21] : memref<8x1xi32, #tpu.memory_space<vmem>>, vector<8x1xi32>
    %36 = vector.broadcast %35 : vector<8x1xi32> to vector<8x128xi32>
    %37 = arith.cmpi eq, %22, %36 : vector<8x128xi32>
    %cst_22 = arith.constant 0.000000e+00 : f32
    %38 = vector.broadcast %cst_22 : f32 to vector<8x128xf32>
    %39 = arith.select %37, %30, %38 : vector<8x128xi1>, vector<8x128xf32>
    %cst_23 = arith.constant dense<0.000000e+00> : vector<8xf32>
    %40 = vector.multi_reduction <add>, %39, %cst_23 [1] : vector<8x128xf32> to vector<8xf32>
    %41 = vector.shape_cast %40 : vector<8xf32> to vector<8x1xf32>
    %42 = arith.subf %41, %34 : vector<8x1xf32>
    %43 = tpu.reciprocal %33 {approx = true} : vector<8x1xf32> -> vector<8x1xf32>
    %44 = arith.mulf %31, %30 : vector<8x128xf32>
    %cst_24 = arith.constant 0.000000e+00 : f32
    %45 = vector.broadcast %cst_24 : f32 to vector<8x128xf32>
    %46 = arith.select %24, %44, %45 : vector<8x128xi1>, vector<8x128xf32>
    %cst_25 = arith.constant dense<0.000000e+00> : vector<8xf32>
    %47 = vector.multi_reduction <add>, %46, %cst_25 [1] : vector<8x128xf32> to vector<8xf32>
    %48 = vector.shape_cast %47 : vector<8xf32> to vector<8x1xf32>
    %49 = arith.mulf %48, %43 : vector<8x1xf32>
    %50 = arith.subf %34, %49 : vector<8x1xf32>
    %c7_i32 = arith.constant 7 : i32
    %51 = vector.broadcast %c7_i32 : i32 to vector<8x128xi32>
    %52 = arith.cmpi eq, %22, %51 : vector<8x128xi32>
    %c8_i32 = arith.constant 8 : i32
    %53 = vector.broadcast %c8_i32 : i32 to vector<8x128xi32>
    %54 = arith.cmpi eq, %22, %53 : vector<8x128xi32>
    %55 = vector.shape_cast %50 : vector<8x1xf32> to vector<8x1xf32>
    %56 = vector.broadcast %55 : vector<8x1xf32> to vector<8x128xf32>
    %57 = arith.select %54, %56, %21 : vector<8x128xi1>, vector<8x128xf32>
    %58 = vector.shape_cast %42 : vector<8x1xf32> to vector<8x1xf32>
    %59 = vector.broadcast %58 : vector<8x1xf32> to vector<8x128xf32>
    %60 = arith.select %52, %59, %57 : vector<8x128xi1>, vector<8x128xf32>
    %c0_26 = arith.constant 0 : index
    %c0_27 = arith.constant 0 : index
    %61 = vector.load %arg9[%c0_26, %c0_27] : memref<8x128xf32, #tpu.memory_space<vmem>>, vector<8x128xf32>
    tpu.vector_store %arg9[%c0_26, %c0_27], %60 {strides = array<i32>} : memref<8x128xf32, #tpu.memory_space<vmem>>, vector<8x128xf32>,
    return
  }
  func.func @transform_0(%arg0: i32) -> (i32, i32) {
    %c0_i32 = arith.constant 0 : i32
    %c0_i32_0 = arith.constant 0 : i32
    return %arg0, %c0_i32 : i32, i32
  }
  func.func @transform_1(%arg0: i32) -> (i32, i32) {
    %c0_i32 = arith.constant 0 : i32
    %c0_i32_0 = arith.constant 0 : i32
    return %arg0, %c0_i32 : i32, i32
  }
  func.func @transform_2(%arg0: i32) -> (i32, i32) {
    %c0_i32 = arith.constant 0 : i32
    %c0_i32_0 = arith.constant 0 : i32
    %c0_i32_1 = arith.constant 0 : i32
    return %c0_i32, %c0_i32_0 : i32, i32
  }
  func.func @transform_3(%arg0: i32) -> (i32, i32) {
    %c0_i32 = arith.constant 0 : i32
    %c0_i32_0 = arith.constant 0 : i32
    %c0_i32_1 = arith.constant 0 : i32
    return %c0_i32, %c0_i32_0 : i32, i32
  }
  func.func @transform_4(%arg0: i32) -> (i32, i32) {
    %c0_i32 = arith.constant 0 : i32
    %c0_i32_0 = arith.constant 0 : i32
    %c0_i32_1 = arith.constant 0 : i32
    return %c0_i32, %c0_i32_0 : i32, i32
  }
  func.func @transform_5(%arg0: i32) -> (i32, i32) {
    %c0_i32 = arith.constant 0 : i32
    %c0_i32_0 = arith.constant 0 : i32
    %c0_i32_1 = arith.constant 0 : i32
    return %c0_i32, %c0_i32_0 : i32, i32
  }
  func.func @transform_6(%arg0: i32) -> (i32, i32) {
    %c0_i32 = arith.constant 0 : i32
    %c0_i32_0 = arith.constant 0 : i32
    %c0_i32_1 = arith.constant 0 : i32
    return %c0_i32, %c0_i32_0 : i32, i32
  }
  func.func @transform_7(%arg0: i32) -> (i32, i32) {
    %c0_i32 = arith.constant 0 : i32
    %c0_i32_0 = arith.constant 0 : i32
    %c0_i32_1 = arith.constant 0 : i32
    return %c0_i32, %c0_i32_0 : i32, i32
  }
  func.func @transform_8(%arg0: i32) -> (i32, i32) {
    %c0_i32 = arith.constant 0 : i32
    %c0_i32_0 = arith.constant 0 : i32
    return %arg0, %c0_i32 : i32, i32
  }
}

</mosaic_0001>

<llo_original>
// kernel: tpu_custom_call.1
$region0: #{tpu_custom_call.1}
  #allocation0 [shape = 'u32[]', space=smem, size = 0x4, offset = 0x4, fixed_abs, tag = 'smem constant byte address 0x4 - core index']
  #allocation1 [shape = 'u32[144,128]{1,0:T(1,128)}', space=vmem, size = 0x12000, scoped, tag = 'internal scratch']
  %s0 = inlined_call_operand.vmem [shape: bf16[8,16], index: 0, kind: input, shape index: {}]
  %s1 = inlined_call_operand.vmem [shape: s32[8,1], index: 1, kind: input, shape index: {}]
  %s2 = inlined_call_operand.vmem [shape: bf16[16,128], index: 2, kind: input, shape index: {}]
  %s3 = inlined_call_operand.vmem [shape: f32[1,128], index: 3, kind: input, shape index: {}]
  %s4 = inlined_call_operand.hbm [shape: bf16[128,128], index: 4, kind: input, shape index: {}]
  %s5 = inlined_call_operand.vmem [shape: f32[1,128], index: 5, kind: input, shape index: {}]
  %s6 = inlined_call_operand.hbm [shape: bf16[128,128], index: 6, kind: input, shape index: {}]
  %s7 = inlined_call_operand.vmem [shape: f32[1,128], index: 7, kind: input, shape index: {}]
  %s8 = inlined_call_operand.hbm [shape: f32[8,128], index: 8, kind: output, shape index: {}]
  %s9 = sld [smem:[#allocation0]]
  $region50: #{tpu_custom_call.1} parent=0
    _
  %s11 = ssub.s32 1, %s9
  %s12 = scalar_select 0, %s11, %s9
  $region1: #{tpu_custom_call.1} parent=0
    #allocation2 [shape = 'u8[32768]{0}', space=vmem, size = 0x8000, scoped, tag = 'input window, operand 4, single buffered']
    #allocation3 [shape = 's32[1]{0}', space=sflag, size = 0x4, scoped, tag = 'scoped memory for tpu_custom_call.1']
    #allocation4 [shape = 's32[1]{0}', space=sflag, size = 0x4, scoped, tag = 'scoped memory for tpu_custom_call.1']
    #allocation5 [shape = 'u8[32768]{0}', space=vmem, size = 0x8000, scoped, tag = 'input window, operand 6, single buffered']
    #allocation6 [shape = 's32[1]{0}', space=sflag, size = 0x4, scoped, tag = 'scoped memory for tpu_custom_call.1']
    #allocation7 [shape = 'u8[4096]{0}', space=vmem, size = 0x1000, scoped, tag = 'output window, operand 0, single buffered']
    %13 = vsyncpa [#allocation3], 0
    %14 = vsyncpa [#allocation6], 0
    %15 = vsyncpa [#allocation4], 0
    // Predicated region
    $region2: #{tpu_custom_call.1} parent=1 // pred_check
      _
    $region3: #{tpu_custom_call.1} parent=1 // pred_check_branch
      %17 = sbr.rel (0) target = $region5
    $region4: #{tpu_custom_call.1} parent=1 // pred_region
      _
    $region5: #{tpu_custom_call.1} parent=1 // pred_fallthru
      _
    // Predicated region
    $region6: #{tpu_custom_call.1} parent=1 // pred_check
      _
    $region7: #{tpu_custom_call.1} parent=1 // pred_check_branch
      %19 = sbr.rel (0) target = $region9
    $region8: #{tpu_custom_call.1} parent=1 // pred_region
      _
    $region9: #{tpu_custom_call.1} parent=1 // pred_fallthru
      _
    // Predicated region
    $region10: #{tpu_custom_call.1} parent=1 // pred_check
      _
    $region11: #{tpu_custom_call.1} parent=1 // pred_check_branch
      %21 = sbr.rel (0) target = $region13
    $region12: #{tpu_custom_call.1} parent=1 // pred_region
      _
    $region13: #{tpu_custom_call.1} parent=1 // pred_fallthru
      _
    // Predicated region
    $region14: #{tpu_custom_call.1} parent=1 // pred_check
      _
    $region15: #{tpu_custom_call.1} parent=1 // pred_check_branch
      %23 = sbr.rel (0) target = $region17
    $region16: #{tpu_custom_call.1} parent=1 // pred_region
      _
    $region17: #{tpu_custom_call.1} parent=1 // pred_fallthru
      _
    // Predicated region
    $region18: #{tpu_custom_call.1} parent=1 // pred_check
      _
    $region19: #{tpu_custom_call.1} parent=1 // pred_check_branch
      %25 = sbr.rel (0) target = $region21
    $region20: #{tpu_custom_call.1} parent=1 // pred_region
      %s27 = ssub.s32 1024, 1024
      %28 = vsyncadd [#allocation3], %s27
      %s29 = sshll.u32 [#allocation2], 4
      %s30 = int_to_ptr.vmem [resolvable:$true] %s29
      %35 = dma.hbm_to_vmem [thread:$0]  %s4, 1024, %s30, [#allocation3], 64, 64, 4
    $region21: #{tpu_custom_call.1} parent=1 // pred_fallthru
      _
    // Predicated region
    $region22: #{tpu_custom_call.1} parent=1 // pred_check
      _
    $region23: #{tpu_custom_call.1} parent=1 // pred_check_branch
      %37 = sbr.rel (0) target = $region25
    $region24: #{tpu_custom_call.1} parent=1 // pred_region
      _
    $region25: #{tpu_custom_call.1} parent=1 // pred_fallthru
      _
    // Predicated region
    $region26: #{tpu_custom_call.1} parent=1 // pred_check
      _
    $region27: #{tpu_custom_call.1} parent=1 // pred_check_branch
      %39 = sbr.rel (0) target = $region29
    $region28: #{tpu_custom_call.1} parent=1 // pred_region
      %s41 = ssub.s32 1024, 1024
      %42 = vsyncadd [#allocation6], %s41
      %s43 = sshll.u32 [#allocation5], 4
      %s44 = int_to_ptr.vmem [resolvable:$true] %s43
      %49 = dma.hbm_to_vmem [thread:$0]  %s6, 1024, %s44, [#allocation6], 64, 64, 4
    $region29: #{tpu_custom_call.1} parent=1 // pred_fallthru
      _
    // Predicated region
    $region30: #{tpu_custom_call.1} parent=1 // pred_check
      _
    $region31: #{tpu_custom_call.1} parent=1 // pred_check_branch
      %51 = sbr.rel (0) target = $region33
    $region32: #{tpu_custom_call.1} parent=1 // pred_region
      _
    $region33: #{tpu_custom_call.1} parent=1 // pred_fallthru
      _
    // Predicated region
    $region34: #{tpu_custom_call.1} parent=1 // pred_check
      _
    $region35: #{tpu_custom_call.1} parent=1 // pred_check_branch
      %53 = sbr.rel (0) target = $region37
    $region36: #{tpu_custom_call.1} parent=1 // pred_region
      %54 = dma.done [#allocation3], 1024
    $region37: #{tpu_custom_call.1} parent=1 // pred_fallthru
      _
    // Predicated region
    $region38: #{tpu_custom_call.1} parent=1 // pred_check
      _
    $region39: #{tpu_custom_call.1} parent=1 // pred_check_branch
      %56 = sbr.rel (0) target = $region41
    $region40: #{tpu_custom_call.1} parent=1 // pred_region
      %57 = dma.done [#allocation6], 1024
    $region41: #{tpu_custom_call.1} parent=1 // pred_fallthru
      _
    %v59 = vld [vmem:[%s0] sm:$0xf]
    %v60 = vld [vmem:[%s2] sm:$0xf]
    %v61 = vld [vmem:[%s2 + $0x4] sm:$0xf]
    %v62 = vld [vmem:[%s3] sm:$0x1]
    %v64 = vlaneseq
    %v65 = vshrl.u32 %v64, 7
    %v66 = vsub.s32 0, %v65
    %v67 = vrot.slane %v62, %v66
    %v71 = vunpack.c.l.b16 %v60
    %v72 = vunpack.c.l.b16 %v61
    %v73 = vpack.c.b16 %v72, %v71
    %vm75 = vcmask 130048
    %v77 = vsel %vm75, %v59, 0
    %79 = vmatprep.subr.bf16.mxu0 0
    %80 = vmatpush1.bf16.msra.mxu0 0
    %81 = vmatprep.subr.bf16.mxu0 0
    %82 = vmatpush1.bf16.msra.mxu0 0
    %83 = vmatprep.subr.bf16.mxu0 0
    %84 = vmatpush1.bf16.msra.mxu0 0
    %85 = vmatprep.subr.bf16.mxu0 0
    %86 = vmatpush1.bf16.msra.mxu0 0
    %87 = vmatprep.subr.bf16.mxu0 0
    %88 = vmatpush1.bf16.msra.mxu0 0
    %89 = vmatprep.subr.bf16.mxu0 0
    %90 = vmatpush1.bf16.msra.mxu0 0
    %91 = vmatprep.subr.bf16.mxu0 0
    %92 = vmatpush1.bf16.msra.mxu0 0
    %93 = vmatprep.subr.bf16.mxu0 0
    %94 = vmatpush1.bf16.msra.mxu0 %v73
    %95 = vmatprep.subr.bf16.mxu0 0
    %96 = vmatpush2.bf16.msra.mxu0 0
    %97 = vmatprep.subr.bf16.mxu0 0
    %98 = vmatpush2.bf16.msra.mxu0 0
    %99 = vmatprep.subr.bf16.mxu0 0
    %100 = vmatpush2.bf16.msra.mxu0 0
    %101 = vmatprep.subr.bf16.mxu0 0
    %102 = vmatpush2.bf16.msra.mxu0 0
    %103 = vmatprep.subr.bf16.mxu0 0
    %104 = vmatpush2.bf16.msra.mxu0 0
    %105 = vmatprep.subr.bf16.mxu0 0
    %106 = vmatpush2.bf16.msra.mxu0 0
    %107 = vmatprep.subr.bf16.mxu0 0
    %108 = vmatpush2.bf16.msra.mxu0 0
    %109 = vmatprep.subr.bf16.mxu0 0
    %110 = vmatpush2.bf16.msra.mxu0 0
    %111 = vmatprep.mubr.bf16.mxu0 0
    %112 = vmatmul.mubr.bf16.gmra.mxu0 %v77
    %v113 = vpop.f32.mrf.mxu0
    %v114 = vadd.f32 %v67, %v113
    %v115 = vpop.f32.mrf.mxu0
    %v116 = vpop.f32.mrf.mxu0
    %v117 = vpop.f32.mrf.mxu0
    %118 = vdwg.mxu0
    %v119 = vmax.f32 %v114, 0.0
    %v120 = vpack.c.bf16 %v119, %v119
    %v121 = vld [vmem:[#allocation2] sm:$0xf]
    %v122 = vld [vmem:[#allocation2 + $0x4] sm:$0xf]
    %v123 = vld [vmem:[#allocation2 + $0x8] sm:$0xf]
    %v124 = vld [vmem:[#allocation2 + $0xc] sm:$0xf]
    %v125 = vld [vmem:[#allocation2 + $0x10] sm:$0xf]
    %v126 = vld [vmem:[#allocation2 + $0x14] sm:$0xf]
    %v127 = vld [vmem:[#allocation2 + $0x18] sm:$0xf]
    %v128 = vld [vmem:[#allocation2 + $0x1c] sm:$0xf]
    %v129 = vld [vmem:[#allocation2 + $0x20] sm:$0xf]
    %v130 = vld [vmem:[#allocation2 + $0x24] sm:$0xf]
    %v131 = vld [vmem:[#allocation2 + $0x28] sm:$0xf]
    %v132 = vld [vmem:[#allocation2 + $0x2c] sm:$0xf]
    %v133 = vld [vmem:[#allocation2 + $0x30] sm:$0xf]
    %v134 = vld [vmem:[#allocation2 + $0x34] sm:$0xf]
    %v135 = vld [vmem:[#allocation2 + $0x38] sm:$0xf]
    %v136 = vld [vmem:[#allocation2 + $0x3c] sm:$0xf]
    %v137 = vld [vmem:[%s5] sm:$0x1]
    %v139 = vlaneseq
    %v140 = vshrl.u32 %v139, 7
    %v141 = vsub.s32 0, %v140
    %v142 = vrot.slane %v137, %v141
    %v160 = vunpack.c.l.b16 %v121
    %v161 = vunpack.c.l.b16 %v122
    %v162 = vunpack.c.l.b16 %v123
    %v163 = vunpack.c.l.b16 %v124
    %v164 = vunpack.c.l.b16 %v125
    %v165 = vunpack.c.l.b16 %v126
    %v166 = vunpack.c.l.b16 %v127
    %v167 = vunpack.c.l.b16 %v128
    %v168 = vunpack.c.l.b16 %v129
    %v169 = vunpack.c.l.b16 %v130
    %v170 = vunpack.c.l.b16 %v131
    %v171 = vunpack.c.l.b16 %v132
    %v172 = vunpack.c.l.b16 %v133
    %v173 = vunpack.c.l.b16 %v134
    %v174 = vunpack.c.l.b16 %v135
    %v175 = vunpack.c.l.b16 %v136
    %v176 = vpack.c.b16 %v161, %v160
    %v177 = vpack.c.b16 %v163, %v162
    %v178 = vpack.c.b16 %v165, %v164
    %v179 = vpack.c.b16 %v167, %v166
    %v180 = vpack.c.b16 %v169, %v168
    %v181 = vpack.c.b16 %v171, %v170
    %v182 = vpack.c.b16 %v173, %v172
    %v183 = vpack.c.b16 %v175, %v174
    %192 = vmatprep.subr.bf16.mxu0 0
    %193 = vmatpush1.bf16.msra.mxu0 %v183
    %194 = vmatprep.subr.bf16.mxu0 0
    %195 = vmatpush1.bf16.msra.mxu0 %v182
    %196 = vmatprep.subr.bf16.mxu0 0
    %197 = vmatpush1.bf16.msra.mxu0 %v181
    %198 = vmatprep.subr.bf16.mxu0 0
    %199 = vmatpush1.bf16.msra.mxu0 %v180
    %200 = vmatprep.subr.bf16.mxu0 0
    %201 = vmatpush1.bf16.msra.mxu0 %v179
    %202 = vmatprep.subr.bf16.mxu0 0
    %203 = vmatpush1.bf16.msra.mxu0 %v178
    %204 = vmatprep.subr.bf16.mxu0 0
    %205 = vmatpush1.bf16.msra.mxu0 %v177
    %206 = vmatprep.subr.bf16.mxu0 0
    %207 = vmatpush1.bf16.msra.mxu0 %v176
    %208 = vmatprep.subr.bf16.mxu0 0
    %209 = vmatpush2.bf16.msra.mxu0 0
    %210 = vmatprep.subr.bf16.mxu0 0
    %211 = vmatpush2.bf16.msra.mxu0 0
    %212 = vmatprep.subr.bf16.mxu0 0
    %213 = vmatpush2.bf16.msra.mxu0 0
    %214 = vmatprep.subr.bf16.mxu0 0
    %215 = vmatpush2.bf16.msra.mxu0 0
    %216 = vmatprep.subr.bf16.mxu0 0
    %217 = vmatpush2.bf16.msra.mxu0 0
    %218 = vmatprep.subr.bf16.mxu0 0
    %219 = vmatpush2.bf16.msra.mxu0 0
    %220 = vmatprep.subr.bf16.mxu0 0
    %221 = vmatpush2.bf16.msra.mxu0 0
    %222 = vmatprep.subr.bf16.mxu0 0
    %223 = vmatpush2.bf16.msra.mxu0 0
    %224 = vmatprep.mubr.bf16.mxu0 0
    %225 = vmatmul.mubr.bf16.gmra.mxu0 %v120
    %v226 = vpop.f32.mrf.mxu0
    %v227 = vadd.f32 %v142, %v226
    %v228 = vpop.f32.mrf.mxu0
    %v229 = vpop.f32.mrf.mxu0
    %v230 = vpop.f32.mrf.mxu0
    %231 = vdwg.mxu0
    %v232 = vmax.f32 %v227, 0.0
    %v233 = vpack.c.bf16 %v232, %v232
    %v234 = vld [vmem:[#allocation5] sm:$0xf]
    %v235 = vld [vmem:[#allocation5 + $0x4] sm:$0xf]
    %v236 = vld [vmem:[#allocation5 + $0x8] sm:$0xf]
    %v237 = vld [vmem:[#allocation5 + $0xc] sm:$0xf]
    %v238 = vld [vmem:[#allocation5 + $0x10] sm:$0xf]
    %v239 = vld [vmem:[#allocation5 + $0x14] sm:$0xf]
    %v240 = vld [vmem:[#allocation5 + $0x18] sm:$0xf]
    %v241 = vld [vmem:[#allocation5 + $0x1c] sm:$0xf]
    %v242 = vld [vmem:[#allocation5 + $0x20] sm:$0xf]
    %v243 = vld [vmem:[#allocation5 + $0x24] sm:$0xf]
    %v244 = vld [vmem:[#allocation5 + $0x28] sm:$0xf]
    %v245 = vld [vmem:[#allocation5 + $0x2c] sm:$0xf]
    %v246 = vld [vmem:[#allocation5 + $0x30] sm:$0xf]
    %v247 = vld [vmem:[#allocation5 + $0x34] sm:$0xf]
    %v248 = vld [vmem:[#allocation5 + $0x38] sm:$0xf]
    %v249 = vld [vmem:[#allocation5 + $0x3c] sm:$0xf]
    %v250 = vld [vmem:[%s7] sm:$0x1]
    %v252 = vlaneseq
    %v253 = vshrl.u32 %v252, 7
    %v254 = vsub.s32 0, %v253
    %v255 = vrot.slane %v250, %v254
    %v273 = vunpack.c.l.b16 %v234
    %v274 = vunpack.c.l.b16 %v235
    %v275 = vunpack.c.l.b16 %v236
    %v276 = vunpack.c.l.b16 %v237
    %v277 = vunpack.c.l.b16 %v238
    %v278 = vunpack.c.l.b16 %v239
    %v279 = vunpack.c.l.b16 %v240
    %v280 = vunpack.c.l.b16 %v241
    %v281 = vunpack.c.l.b16 %v242
    %v282 = vunpack.c.l.b16 %v243
    %v283 = vunpack.c.l.b16 %v244
    %v284 = vunpack.c.l.b16 %v245
    %v285 = vunpack.c.l.b16 %v246
    %v286 = vunpack.c.l.b16 %v247
    %v287 = vunpack.c.l.b16 %v248
    %v288 = vunpack.c.l.b16 %v249
    %v289 = vpack.c.b16 %v274, %v273
    %v290 = vpack.c.b16 %v276, %v275
    %v291 = vpack.c.b16 %v278, %v277
    %v292 = vpack.c.b16 %v280, %v279
    %v293 = vpack.c.b16 %v282, %v281
    %v294 = vpack.c.b16 %v284, %v283
    %v295 = vpack.c.b16 %v286, %v285
    %v296 = vpack.c.b16 %v288, %v287
    %305 = vmatprep.subr.bf16.mxu0 0
    %306 = vmatpush1.bf16.msra.mxu0 %v296
    %307 = vmatprep.subr.bf16.mxu0 0
    %308 = vmatpush1.bf16.msra.mxu0 %v295
    %309 = vmatprep.subr.bf16.mxu0 0
    %310 = vmatpush1.bf16.msra.mxu0 %v294
    %311 = vmatprep.subr.bf16.mxu0 0
    %312 = vmatpush1.bf16.msra.mxu0 %v293
    %313 = vmatprep.subr.bf16.mxu0 0
    %314 = vmatpush1.bf16.msra.mxu0 %v292
    %315 = vmatprep.subr.bf16.mxu0 0
    %316 = vmatpush1.bf16.msra.mxu0 %v291
    %317 = vmatprep.subr.bf16.mxu0 0
    %318 = vmatpush1.bf16.msra.mxu0 %v290
    %319 = vmatprep.subr.bf16.mxu0 0
    %320 = vmatpush1.bf16.msra.mxu0 %v289
    %321 = vmatprep.subr.bf16.mxu0 0
    %322 = vmatpush2.bf16.msra.mxu0 0
    %323 = vmatprep.subr.bf16.mxu0 0
    %324 = vmatpush2.bf16.msra.mxu0 0
    %325 = vmatprep.subr.bf16.mxu0 0
    %326 = vmatpush2.bf16.msra.mxu0 0
    %327 = vmatprep.subr.bf16.mxu0 0
    %328 = vmatpush2.bf16.msra.mxu0 0
    %329 = vmatprep.subr.bf16.mxu0 0
    %330 = vmatpush2.bf16.msra.mxu0 0
    %331 = vmatprep.subr.bf16.mxu0 0
    %332 = vmatpush2.bf16.msra.mxu0 0
    %333 = vmatprep.subr.bf16.mxu0 0
    %334 = vmatpush2.bf16.msra.mxu0 0
    %335 = vmatprep.subr.bf16.mxu0 0
    %336 = vmatpush2.bf16.msra.mxu0 0
    %337 = vmatprep.mubr.bf16.mxu0 0
    %338 = vmatmul.mubr.bf16.gmra.mxu0 %v233
    %v339 = vpop.f32.mrf.mxu0
    %v340 = vadd.f32 %v255, %v339
    %v341 = vpop.f32.mrf.mxu0
    %v342 = vpop.f32.mrf.mxu0
    %v343 = vpop.f32.mrf.mxu0
    %344 = vdwg.mxu0
    %v345 = vlaneseq
    %v346 = vand.u32 %v345, 127
    %vm347 = vcmp.lt.s32.totalorder %v346, 6
    %v348 = vsel %vm347, %v340, -1e+30
    %349 = vmax.xlane.f32.xlu0 %v348
    %v350 = vpop.xlane.xlu0 %349
    %v351 = vsub.f32 %v348, %v350
    %v352 = vmul.f32 %v351, 1.442695
    %v353 = vpow.pop %v352
    %354 = vadd.xlane.f32.xlu0 %v353
    %v355 = vpop.xlane.xlu0 %354
    %v356 = vlog2.pop %v355
    %v357 = vmul.f32 %v356, 0.6931472
    %v358 = vld [vmem:[%s1] sm:$0xff]
    %359 = vset.pattern.permute.xlu0 0
    %360 = vperm.xlu0 %359, %v358
    %v361 = vpop.permute.xlu0 %360
    %vm362 = vcmp.eq.s32.totalorder %v346, %v361
    %v363 = vsel %vm362, %v351, 0.0
    %364 = vadd.xlane.f32.xlu0 %v363
    %v365 = vpop.xlane.xlu0 %364
    %v366 = vsub.f32 %v365, %v357
    %v367 = vrcp.pop %v355
    %v368 = vmul.f32 %v353, %v351
    %v369 = vsel %vm347, %v368, 0.0
    %370 = vadd.xlane.f32.xlu0 %v369
    %v371 = vpop.xlane.xlu0 %370
    %v372 = vmul.f32 %v371, %v367
    %v373 = vsub.f32 %v357, %v372
    %vm374 = vcmp.eq.s32.totalorder %v346, 7
    %vm375 = vcmp.eq.s32.totalorder %v346, 8
    %v376 = vsel %vm375, %v373, %v340
    %v377 = vsel %vm374, %v366, %v376
    %378 = vst [vmem:[#allocation7] sm:$0xff] %v377
    // Predicated region
    $region42: #{tpu_custom_call.1} parent=1 // pred_check
      _
    $region43: #{tpu_custom_call.1} parent=1 // pred_check_branch
      %380 = sbr.rel (0) target = $region45
    $region44: #{tpu_custom_call.1} parent=1 // pred_region
      %s382 = ssub.s32 128, 128
      %383 = vsyncadd [#allocation4], %s382
      %s385 = sshll.u32 [#allocation7], 4
      %s386 = int_to_ptr.vmem [resolvable:$true] %s385
      %388 = dma.vmem_to_hbm [thread:$0]  %s386, 128, %s8, [#allocation4]
    $region45: #{tpu_custom_call.1} parent=1 // pred_fallthru
      _
    // Predicated region
    $region46: #{tpu_custom_call.1} parent=1 // pred_check
      _
    $region47: #{tpu_custom_call.1} parent=1 // pred_check_branch
      %390 = sbr.rel (0) target = $region49
    $region48: #{tpu_custom_call.1} parent=1 // pred_region
      %391 = dma.done [#allocation4], 128
    $region49: #{tpu_custom_call.1} parent=1 // pred_fallthru
      _
    %392 = vsyncpa [#allocation3], 1
    %393 = vsyncpa [#allocation6], 1
    %394 = vsyncpa [#allocation4], 1

</llo_original>
